<compile_context>
chip_gen: v6e
topology: v6e:2x2x1
jax: 0.10.0
libtpu: 0.0.40
codegen_flags: <defaults>
</compile_context>

<pallas_src>
import functools

import jax
import jax.numpy as jnp
from jax.experimental import pallas as pl
from jax.experimental.pallas import tpu as pltpu


def _self_attention_kernel(
    x_ref,        # (1, S, E)       input (one batch sample)
    ln_w_ref,     # (1, E)          LayerNorm weight
    ln_b_ref,     # (1, E)          LayerNorm bias
    wqkv_ref,     # (1, E, 3*Dh)    packed per-head [Wq*scale | Wk | Wv]
    bqkv_ref,     # (1, 1, 3*Dh)    packed per-head [bq*scale | 0 | bv]
    wo_ref,       # (1, Dh, E)      rows of W_out^T belonging to this head
    bo_ref,       # (1, E)          out-proj bias
    o_ref,        # (1, TQ, E)      output tile
    xn_vmem,      # (S, E)          LayerNorm'd activations (compute dtype)
    acc_vmem,     # (TQ, E) f32     output accumulator across heads
    *,
    head_dim: int,
    q_block: int,
    eps: float,
    compute_dtype,
):
    qi = pl.program_id(1)
    h = pl.program_id(2)
    seq_len = xn_vmem.shape[0]

    # ---- once per (batch, q-tile): LayerNorm (f32 stats) + accumulator init ----
    @pl.when(h == 0)
    def _():
        x = x_ref[0].astype(jnp.float32)
        mean = jnp.mean(x, axis=-1, keepdims=True)
        xc = x - mean
        var = jnp.mean(xc * xc, axis=-1, keepdims=True)
        xn = xc * jax.lax.rsqrt(var + eps)
        xn = xn * ln_w_ref[...].astype(jnp.float32) + ln_b_ref[...].astype(jnp.float32)
        xn_vmem[...] = xn.astype(xn_vmem.dtype)
        acc_vmem[...] = jnp.broadcast_to(
            bo_ref[...].astype(jnp.float32), acc_vmem.shape)

    xn = xn_vmem[...]                                        # (S, E), compute dtype

    # ---- fused per-head QKV projection: one (S, E) @ (E, 3*Dh) MXU matmul ----
    qkv = jnp.dot(xn, wqkv_ref[0], preferred_element_type=jnp.float32)
    qkv = qkv + bqkv_ref[0].astype(jnp.float32)              # (S, 3*Dh)

    dh = head_dim
    k = qkv[:, dh:2 * dh].astype(compute_dtype)              # (S, Dh)
    v = qkv[:, 2 * dh:].astype(compute_dtype)                # (S, Dh)
    q_full = qkv[:, :dh]                                     # scale & bias pre-folded
    if q_block == seq_len:
        q = q_full
    else:
        q = jax.lax.dynamic_slice_in_dim(q_full, qi * q_block, q_block, axis=0)
    q = q.astype(compute_dtype)                              # (TQ, Dh)

    # ---- softmax(q k^T) v with deferred normalization ----
    s = jax.lax.dot_general(q, k, (((1,), (1,)), ((), ())),
                            preferred_element_type=jnp.float32)   # (TQ, S)
    m = jnp.max(s, axis=-1, keepdims=True)
    p = jnp.exp(s - m)
    l = jnp.sum(p, axis=-1, keepdims=True)
    ctx = jnp.dot(p.astype(compute_dtype), v,
                  preferred_element_type=jnp.float32)             # (TQ, Dh)
    ctx = ctx * pl.reciprocal(l, approx=True)

    # ---- accumulate this head's slice of the output projection ----
    acc_vmem[...] += jnp.dot(ctx.astype(compute_dtype), wo_ref[0],
                             preferred_element_type=jnp.float32)

    @pl.when(h == pl.num_programs(2) - 1)
    def _():
        o_ref[0] = acc_vmem[...].astype(o_ref.dtype)


def _pick_q_block(seq_len: int) -> int:
    if seq_len <= 512:
        return seq_len
    for cand in (512, 256, 128, 64, 32, 16, 8):
        if seq_len % cand == 0:
            return cand
    return seq_len


def self_attention_forward(x, params, num_heads: int, *, eps: float = 1e-5,
                           compute_dtype=None, q_block=None,
                           vmem_limit_bytes: int = 48 * 1024 * 1024):
    """JAX/Pallas equivalent of SelfAttention.forward (pad_mask/attn_mask=None)."""
    B, S, E = x.shape
    assert E % num_heads == 0, "num_channels must be divisible by num_heads"
    head_dim = E // num_heads
    if compute_dtype is None:
        compute_dtype = x.dtype
    if q_block is None:
        q_block = _pick_q_block(S)
    assert S % q_block == 0, "q_block must divide the sequence length"
    num_q_blocks = S // q_block

    w_in = params["in_proj_weight"]      # (3E, E) packed [Wq; Wk; Wv]
    b_in = params["in_proj_bias"]        # (3E,)
    w_out = params["out_proj_weight"]    # (E, E)
    b_out = params["out_proj_bias"]      # (E,)
    scale = 1.0 / float(head_dim) ** 0.5

    def per_head(w):                     # (E, E) rows=out feats -> (H, E, Dh)
        return jnp.transpose(w.reshape(num_heads, head_dim, E), (0, 2, 1))

    # Fold the 1/sqrt(Dh) scale into the Q weights/bias; drop the K bias
    # (it only shifts each score row by a constant, which softmax cancels).
    wq = per_head(w_in[:E]) * scale
    wk = per_head(w_in[E:2 * E])
    wv = per_head(w_in[2 * E:])
    w_qkv_h = jnp.concatenate([wq, wk, wv], axis=-1).astype(compute_dtype)   # (H,E,3Dh)

    bq = (b_in[:E] * scale).reshape(num_heads, 1, head_dim)
    bv = b_in[2 * E:].reshape(num_heads, 1, head_dim)
    b_qkv_h = jnp.concatenate(
        [bq, jnp.zeros_like(bq), bv], axis=-1).astype(jnp.float32)           # (H,1,3Dh)

    wo_h = jnp.transpose(w_out).reshape(num_heads, head_dim, E).astype(compute_dtype)
    bo = b_out.reshape(1, E).astype(jnp.float32)
    ln_w = params["ln_weight"].reshape(1, E).astype(jnp.float32)
    ln_b = params["ln_bias"].reshape(1, E).astype(jnp.float32)

    kernel = functools.partial(
        _self_attention_kernel, head_dim=head_dim, q_block=q_block, eps=eps,
        compute_dtype=compute_dtype)

    return pl.pallas_call(
        kernel,
        out_shape=jax.ShapeDtypeStruct((B, S, E), x.dtype),
        grid=(B, num_q_blocks, num_heads),
        in_specs=[
            pl.BlockSpec((1, S, E), lambda b, qi, h: (b, 0, 0)),             # x
            pl.BlockSpec((1, E), lambda b, qi, h: (0, 0)),                   # ln weight
            pl.BlockSpec((1, E), lambda b, qi, h: (0, 0)),                   # ln bias
            pl.BlockSpec((1, E, 3 * head_dim), lambda b, qi, h: (h, 0, 0)),  # W_qkv[h]
            pl.BlockSpec((1, 1, 3 * head_dim), lambda b, qi, h: (h, 0, 0)),  # b_qkv[h]
            pl.BlockSpec((1, head_dim, E), lambda b, qi, h: (h, 0, 0)),      # W_out^T[h]
            pl.BlockSpec((1, E), lambda b, qi, h: (0, 0)),                   # b_out
        ],
        out_specs=pl.BlockSpec((1, q_block, E), lambda b, qi, h: (b, qi, 0)),
        scratch_shapes=[
            pltpu.VMEM((S, E), compute_dtype),       # LayerNorm'd activations
            pltpu.VMEM((q_block, E), jnp.float32),   # output accumulator over heads
        ],
        compiler_params=pltpu.CompilerParams(
            dimension_semantics=("parallel", "parallel", "arbitrary"),
            vmem_limit_bytes=vmem_limit_bytes,
        ),
    )(x, ln_w, ln_b, w_qkv_h, b_qkv_h, wo_h, bo)


def self_attention_reference(x, params, num_heads: int, *, eps: float = 1e-5):
    """Pure-JAX reference mirroring PyTorch LayerNorm + nn.MultiheadAttention."""
    B, S, E = x.shape
    head_dim = E // num_heads
    mean = jnp.mean(x, axis=-1, keepdims=True)
    var = jnp.mean((x - mean) ** 2, axis=-1, keepdims=True)
    xn = (x - mean) / jnp.sqrt(var + eps)
    xn = xn * params["ln_weight"] + params["ln_bias"]

    w_in, b_in = params["in_proj_weight"], params["in_proj_bias"]
    q = xn @ w_in[:E].T + b_in[:E]
    k = xn @ w_in[E:2 * E].T + b_in[E:2 * E]
    v = xn @ w_in[2 * E:].T + b_in[2 * E:]

    def to_heads(t):
        return t.reshape(B, S, num_heads, head_dim).transpose(0, 2, 1, 3)

    qh, kh, vh = to_heads(q), to_heads(k), to_heads(v)
    s = jnp.einsum("bhsd,bhtd->bhst", qh, kh) / jnp.sqrt(jnp.float32(head_dim))
    p = jax.nn.softmax(s, axis=-1)
    ctx = jnp.einsum("bhst,bhtd->bhsd", p, vh)
    ctx = ctx.transpose(0, 2, 1, 3).reshape(B, S, E)
    return ctx @ params["out_proj_weight"].T + params["out_proj_bias"]


class SelfAttention:
    """Mirror of the PyTorch SelfAttention module (LayerNorm + MHA, no dropout)."""

    def __init__(self, num_channels: int, num_heads: int, *, key):
        self.num_channels = num_channels
        self.num_heads = num_heads
        E = num_channels
        k1, k2, k3, k4, k5, k6 = jax.random.split(key, 6)
        lim = (6.0 / (E + E)) ** 0.5   # xavier-uniform-ish, like nn.MultiheadAttention
        self.params = {
            "ln_weight": 1.0 + 0.1 * jax.random.normal(k5, (E,), jnp.float32),
            "ln_bias": 0.1 * jax.random.normal(k6, (E,), jnp.float32),
            "in_proj_weight": jax.random.uniform(k1, (3 * E, E), jnp.float32, -lim, lim),
            "in_proj_bias": 0.1 * jax.random.normal(k3, (3 * E,), jnp.float32),
            "out_proj_weight": jax.random.uniform(k2, (E, E), jnp.float32, -lim, lim),
            "out_proj_bias": 0.1 * jax.random.normal(k4, (E,), jnp.float32),
        }

    def __call__(self, x, pad_mask=None, attn_mask=None, **kwargs):
        # TODO(synk): key_padding_mask / attn_mask not supported by the Pallas kernel.
        assert pad_mask is None and attn_mask is None, "masks not supported"
        return self_attention_forward(x, self.params, self.num_heads, **kwargs)


if __name__ == "__main__":
    B, S, E, H = 2, 8, 32, 4
    key = jax.random.PRNGKey(0)
    kx, kp = jax.random.split(key)
    x = jax.random.normal(kx, (B, S, E), dtype=jnp.float32)

    module = SelfAttention(num_channels=E, num_heads=H, key=kp)

    y = jax.block_until_ready(module(x))
    assert y.shape == (B, S, E)

    y_ref = jax.block_until_ready(self_attention_reference(x, module.params, H))
    max_err = float(jnp.max(jnp.abs(y - y_ref)))
    assert jnp.allclose(y, y_ref, atol=2e-2, rtol=2e-2), (
        "Pallas SelfAttention deviates from the pure-JAX reference: "
        f"max abs err = {max_err}")

    # bf16 MXU path (internal matmuls in bf16 with f32 accumulation) smoke test.
    y_bf16 = jax.block_until_ready(
        self_attention_forward(x, module.params, H, compute_dtype=jnp.bfloat16))
    assert y_bf16.shape == (B, S, E)
    assert bool(jnp.all(jnp.isfinite(y_bf16)))

    print("KERNEL_OK")
</pallas_src>

<mosaic_0001>
module attributes {stable_mosaic.version = 11 : i64} {
  func.func @_self_attention_kernel(%arg0: i32, %arg1: i32, %arg2: i32, %arg3: memref<1x8x32xf32, #tpu.memory_space<vmem>>, %arg4: memref<1x32xf32, #tpu.memory_space<vmem>>, %arg5: memref<1x32xf32, #tpu.memory_space<vmem>>, %arg6: memref<1x32x24xf32, #tpu.memory_space<vmem>>, %arg7: memref<1x1x24xf32, #tpu.memory_space<vmem>>, %arg8: memref<1x8x32xf32, #tpu.memory_space<vmem>>, %arg9: memref<1x32xf32, #tpu.memory_space<vmem>>, %arg10: memref<1x8x32xf32, #tpu.memory_space<vmem>>, %arg11: memref<8x32xf32, #tpu.memory_space<vmem>>, %arg12: memref<8x32xf32, #tpu.memory_space<vmem>>) attributes {dimension_semantics = [#tpu.dimension_semantics<parallel>, #tpu.dimension_semantics<parallel>, #tpu.dimension_semantics<arbitrary>], iteration_bounds = array<i64: 2, 1, 4>, scalar_prefetch = 0 : i64, scratch_operands = 2 : i64, tpu.core_type = #tpu.core_type<tc>, window_params = [{transform_indices = @transform_0, window_bounds = array<i64: 1, 8, 32>}, {pipeline_mode = #tpu.pipeline_mode<synchronous>, transform_indices = @transform_1, window_bounds = array<i64: 1, 32>}, {pipeline_mode = #tpu.pipeline_mode<synchronous>, transform_indices = @transform_2, window_bounds = array<i64: 1, 32>}, {transform_indices = @transform_3, window_bounds = array<i64: 1, 32, 24>}, {transform_indices = @transform_4, window_bounds = array<i64: 1, 1, 24>}, {transform_indices = @transform_5, window_bounds = array<i64: 1, 8, 32>}, {pipeline_mode = #tpu.pipeline_mode<synchronous>, transform_indices = @transform_6, window_bounds = array<i64: 1, 32>}, {transform_indices = @transform_7, window_bounds = array<i64: 1, 8, 32>}]} {
    %c0_i32 = arith.constant 0 : i32
    %0 = arith.cmpi eq, %arg2, %c0_i32 : i32
    %1 = arith.extui %0 : i1 to i32
    %c0_i32_0 = arith.constant 0 : i32
    %2 = arith.cmpi ne, %1, %c0_i32_0 : i32
    scf.if %2 {
      %c0_21 = arith.constant 0 : index
      %c0_22 = arith.constant 0 : index
      %c0_23 = arith.constant 0 : index
      %35 = vector.load %arg3[%c0_21, %c0_22, %c0_23] : memref<1x8x32xf32, #tpu.memory_space<vmem>>, vector<1x8x32xf32>
      %36 = vector.shape_cast %35 : vector<1x8x32xf32> to vector<8x32xf32>
      %cst_24 = arith.constant dense<0.000000e+00> : vector<8xf32>
      %37 = vector.multi_reduction <add>, %36, %cst_24 [1] : vector<8x32xf32> to vector<8xf32>
      %38 = vector.shape_cast %37 : vector<8xf32> to vector<8x1xf32>
      %cst_25 = arith.constant 3.200000e+01 : f32
      %39 = vector.broadcast %cst_25 : f32 to vector<8x1xf32>
      %40 = arith.divf %38, %39 : vector<8x1xf32>
      %41 = vector.broadcast %40 : vector<8x1xf32> to vector<8x32xf32>
      %42 = arith.subf %36, %41 : vector<8x32xf32>
      %43 = arith.mulf %42, %42 : vector<8x32xf32>
      %cst_26 = arith.constant dense<0.000000e+00> : vector<8xf32>
      %44 = vector.multi_reduction <add>, %43, %cst_26 [1] : vector<8x32xf32> to vector<8xf32>
      %45 = vector.shape_cast %44 : vector<8xf32> to vector<8x1xf32>
      %cst_27 = arith.constant 3.200000e+01 : f32
      %46 = vector.broadcast %cst_27 : f32 to vector<8x1xf32>
      %47 = arith.divf %45, %46 : vector<8x1xf32>
      %cst_28 = arith.constant 9.99999974E-6 : f32
      %48 = vector.broadcast %cst_28 : f32 to vector<8x1xf32>
      %49 = arith.addf %47, %48 : vector<8x1xf32>
      %50 = math.rsqrt %49 : vector<8x1xf32>
      %51 = vector.broadcast %50 : vector<8x1xf32> to vector<8x32xf32>
      %52 = arith.mulf %42, %51 : vector<8x32xf32>
      %c0_29 = arith.constant 0 : index
      %c0_30 = arith.constant 0 : index
      %53 = vector.load %arg4[%c0_29, %c0_30] : memref<1x32xf32, #tpu.memory_space<vmem>>, vector<1x32xf32>
      %54 = vector.broadcast %53 : vector<1x32xf32> to vector<8x32xf32>
      %55 = arith.mulf %52, %54 : vector<8x32xf32>
      %c0_31 = arith.constant 0 : index
      %c0_32 = arith.constant 0 : index
      %56 = vector.load %arg5[%c0_31, %c0_32] : memref<1x32xf32, #tpu.memory_space<vmem>>, vector<1x32xf32>
      %57 = vector.broadcast %56 : vector<1x32xf32> to vector<8x32xf32>
      %58 = arith.addf %55, %57 : vector<8x32xf32>
      %c0_33 = arith.constant 0 : index
      %c0_34 = arith.constant 0 : index
      %59 = vector.load %arg11[%c0_33, %c0_34] : memref<8x32xf32, #tpu.memory_space<vmem>>, vector<8x32xf32>
      tpu.vector_store %arg11[%c0_33, %c0_34], %58 {strides = array<i32>} : memref<8x32xf32, #tpu.memory_space<vmem>>, vector<8x32xf32>,
      %c0_35 = arith.constant 0 : index
      %c0_36 = arith.constant 0 : index
      %60 = vector.load %arg9[%c0_35, %c0_36] : memref<1x32xf32, #tpu.memory_space<vmem>>, vector<1x32xf32>
      %61 = vector.shape_cast %60 : vector<1x32xf32> to vector<1x32xf32>
      %62 = vector.broadcast %61 : vector<1x32xf32> to vector<8x32xf32>
      %c0_37 = arith.constant 0 : index
      %c0_38 = arith.constant 0 : index
      %63 = vector.load %arg12[%c0_37, %c0_38] : memref<8x32xf32, #tpu.memory_space<vmem>>, vector<8x32xf32>
      tpu.vector_store %arg12[%c0_37, %c0_38], %62 {strides = array<i32>} : memref<8x32xf32, #tpu.memory_space<vmem>>, vector<8x32xf32>,
    } else {
    }
    %c0 = arith.constant 0 : index
    %c0_1 = arith.constant 0 : index
    %3 = vector.load %arg11[%c0, %c0_1] : memref<8x32xf32, #tpu.memory_space<vmem>>, vector<8x32xf32>
    %c0_2 = arith.constant 0 : index
    %c0_3 = arith.constant 0 : index
    %c0_4 = arith.constant 0 : index
    %4 = vector.load %arg6[%c0_2, %c0_3, %c0_4] : memref<1x32x24xf32, #tpu.memory_space<vmem>>, vector<1x32x24xf32>
    %5 = vector.shape_cast %4 : vector<1x32x24xf32> to vector<32x24xf32>
    %cst = arith.constant dense<0.000000e+00> : vector<8x24xf32>
    %6 = tpu.matmul %3, %5, %cst {dimension_numbers = #tpu.dot_dimension_numbers<[1], [0], [0], [1], [0, 0, 1, 1], [], []>} : vector<8x32xf32>, vector<32x24xf32>, vector<8x24xf32> -> vector<8x24xf32>
    %c0_5 = arith.constant 0 : index
    %c0_6 = arith.constant 0 : index
    %c0_7 = arith.constant 0 : index
    %7 = vector.load %arg7[%c0_5, %c0_6, %c0_7] : memref<1x1x24xf32, #tpu.memory_space<vmem>>, vector<1x1x24xf32>
    %8 = vector.shape_cast %7 : vector<1x1x24xf32> to vector<1x24xf32>
    %9 = vector.broadcast %8 : vector<1x24xf32> to vector<8x24xf32>
    %10 = arith.addf %6, %9 : vector<8x24xf32>
    %11 = vector.extract_strided_slice %10 {offsets = [0, 8], sizes = [8, 8], strides = [1, 1]} : vector<8x24xf32> to vector<8x8xf32>
    %12 = vector.extract_strided_slice %10 {offsets = [0, 16], sizes = [8, 8], strides = [1, 1]} : vector<8x24xf32> to vector<8x8xf32>
    %13 = vector.extract_strided_slice %10 {offsets = [0, 0], sizes = [8, 8], strides = [1, 1]} : vector<8x24xf32> to vector<8x8xf32>
    %cst_8 = arith.constant dense<0.000000e+00> : vector<8x8xf32>
    %14 = tpu.matmul %13, %11, %cst_8 {dimension_numbers = #tpu.dot_dimension_numbers<[1], [1], [0], [0], [0, 0, 1, 0], [], []>} : vector<8x8xf32>, vector<8x8xf32>, vector<8x8xf32> -> vector<8x8xf32>
    %cst_9 = arith.constant dense<0xFF800000> : vector<8xf32>
    %15 = vector.multi_reduction <maximumf>, %14, %cst_9 [1] : vector<8x8xf32> to vector<8xf32>
    %16 = vector.shape_cast %15 : vector<8xf32> to vector<8x1xf32>
    %17 = vector.broadcast %16 : vector<8x1xf32> to vector<8x8xf32>
    %18 = arith.subf %14, %17 : vector<8x8xf32>
    %19 = math.exp %18 : vector<8x8xf32>
    %cst_10 = arith.constant dense<0.000000e+00> : vector<8xf32>
    %20 = vector.multi_reduction <add>, %19, %cst_10 [1] : vector<8x8xf32> to vector<8xf32>
    %21 = vector.shape_cast %20 : vector<8xf32> to vector<8x1xf32>
    %cst_11 = arith.constant dense<0.000000e+00> : vector<8x8xf32>
    %22 = tpu.matmul %19, %12, %cst_11 {dimension_numbers = #tpu.dot_dimension_numbers<[1], [0], [0], [1], [0, 0, 1, 1], [], []>} : vector<8x8xf32>, vector<8x8xf32>, vector<8x8xf32> -> vector<8x8xf32>
    %23 = tpu.reciprocal %21 {approx = true} : vector<8x1xf32> -> vector<8x1xf32>
    %24 = vector.broadcast %23 : vector<8x1xf32> to vector<8x8xf32>
    %25 = arith.mulf %22, %24 : vector<8x8xf32>
    %c0_12 = arith.constant 0 : index
    %c0_13 = arith.constant 0 : index
    %26 = vector.load %arg12[%c0_12, %c0_13] : memref<8x32xf32, #tpu.memory_space<vmem>>, vector<8x32xf32>
    %c0_14 = arith.constant 0 : index
    %c0_15 = arith.constant 0 : index
    %c0_16 = arith.constant 0 : index
    %27 = vector.load %arg8[%c0_14, %c0_15, %c0_16] : memref<1x8x32xf32, #tpu.memory_space<vmem>>, vector<1x8x32xf32>
    %28 = vector.shape_cast %27 : vector<1x8x32xf32> to vector<8x32xf32>
    %cst_17 = arith.constant dense<0.000000e+00> : vector<8x32xf32>
    %29 = tpu.matmul %25, %28, %cst_17 {dimension_numbers = #tpu.dot_dimension_numbers<[1], [0], [0], [1], [0, 0, 1, 1], [], []>} : vector<8x8xf32>, vector<8x32xf32>, vector<8x32xf32> -> vector<8x32xf32>
    %30 = arith.addf %26, %29 : vector<8x32xf32>
    %c0_18 = arith.constant 0 : index
    %c0_19 = arith.constant 0 : index
    %31 = vector.load %arg12[%c0_18, %c0_19] : memref<8x32xf32, #tpu.memory_space<vmem>>, vector<8x32xf32>
    tpu.vector_store %arg12[%c0_18, %c0_19], %30 {strides = array<i32>} : memref<8x32xf32, #tpu.memory_space<vmem>>, vector<8x32xf32>,
    %c3_i32 = arith.constant 3 : i32
    %32 = arith.cmpi eq, %arg2, %c3_i32 : i32
    %33 = arith.extui %32 : i1 to i32
    %c0_i32_20 = arith.constant 0 : i32
    %34 = arith.cmpi ne, %33, %c0_i32_20 : i32
    scf.if %34 {
      %c0_21 = arith.constant 0 : index
      %c0_22 = arith.constant 0 : index
      %35 = vector.load %arg12[%c0_21, %c0_22] : memref<8x32xf32, #tpu.memory_space<vmem>>, vector<8x32xf32>
      %c0_23 = arith.constant 0 : index
      %c0_24 = arith.constant 0 : index
      %c0_25 = arith.constant 0 : index
      %36 = vector.load %arg10[%c0_23, %c0_24, %c0_25] : memref<1x8x32xf32, #tpu.memory_space<vmem>>, vector<1x8x32xf32>
      %37 = vector.shape_cast %36 : vector<1x8x32xf32> to vector<8x32xf32>
      %38 = vector.shape_cast %35 : vector<8x32xf32> to vector<1x8x32xf32>
      tpu.vector_store %arg10[%c0_23, %c0_24, %c0_25], %38 {strides = array<i32>} : memref<1x8x32xf32, #tpu.memory_space<vmem>>, vector<1x8x32xf32>,
    } else {
    }
    return
  }
  func.func @transform_0(%arg0: i32, %arg1: i32, %arg2: i32) -> (i32, i32, i32) {
    %c0_i32 = arith.constant 0 : i32
    %c0_i32_0 = arith.constant 0 : i32
    %c0_i32_1 = arith.constant 0 : i32
    return %arg0, %c0_i32, %c0_i32_0 : i32, i32, i32
  }
  func.func @transform_1(%arg0: i32, %arg1: i32, %arg2: i32) -> (i32, i32) {
    %c0_i32 = arith.constant 0 : i32
    %c0_i32_0 = arith.constant 0 : i32
    %c0_i32_1 = arith.constant 0 : i32
    return %c0_i32, %c0_i32_0 : i32, i32
  }
  func.func @transform_2(%arg0: i32, %arg1: i32, %arg2: i32) -> (i32, i32) {
    %c0_i32 = arith.constant 0 : i32
    %c0_i32_0 = arith.constant 0 : i32
    %c0_i32_1 = arith.constant 0 : i32
    return %c0_i32, %c0_i32_0 : i32, i32
  }
  func.func @transform_3(%arg0: i32, %arg1: i32, %arg2: i32) -> (i32, i32, i32) {
    %c0_i32 = arith.constant 0 : i32
    %c0_i32_0 = arith.constant 0 : i32
    %c0_i32_1 = arith.constant 0 : i32
    return %arg2, %c0_i32, %c0_i32_0 : i32, i32, i32
  }
  func.func @transform_4(%arg0: i32, %arg1: i32, %arg2: i32) -> (i32, i32, i32) {
    %c0_i32 = arith.constant 0 : i32
    %c0_i32_0 = arith.constant 0 : i32
    %c0_i32_1 = arith.constant 0 : i32
    return %arg2, %c0_i32, %c0_i32_0 : i32, i32, i32
  }
  func.func @transform_5(%arg0: i32, %arg1: i32, %arg2: i32) -> (i32, i32, i32) {
    %c0_i32 = arith.constant 0 : i32
    %c0_i32_0 = arith.constant 0 : i32
    %c0_i32_1 = arith.constant 0 : i32
    return %arg2, %c0_i32, %c0_i32_0 : i32, i32, i32
  }
  func.func @transform_6(%arg0: i32, %arg1: i32, %arg2: i32) -> (i32, i32) {
    %c0_i32 = arith.constant 0 : i32
    %c0_i32_0 = arith.constant 0 : i32
    %c0_i32_1 = arith.constant 0 : i32
    return %c0_i32, %c0_i32_0 : i32, i32
  }
  func.func @transform_7(%arg0: i32, %arg1: i32, %arg2: i32) -> (i32, i32, i32) {
    %c0_i32 = arith.constant 0 : i32
    %c0_i32_0 = arith.constant 0 : i32
    return %arg0, %arg1, %c0_i32 : i32, i32, i32
  }
}

</mosaic_0001>

<llo_original>
// kernel: tpu_custom_call.1
$region0: #{tpu_custom_call.1}
  #allocation0 [shape = 'u32[]', space=smem, size = 0x4, offset = 0x4, fixed_abs, tag = 'smem constant byte address 0x4 - core index']
  #allocation1 [shape = 'u32[144,128]{1,0:T(1,128)}', space=vmem, size = 0x12000, scoped, tag = 'internal scratch']
  #allocation2 [shape = 'f32[8,32]{1,0:T(8,128)}', space=vmem, size = 0x1000, scoped, tag = 'scratch operand']
  #allocation3 [shape = 'f32[8,32]{1,0:T(8,128)}', space=vmem, size = 0x1000, scoped, tag = 'scratch operand']
  %s0 = inlined_call_operand.vmem [shape: f32[2,8,32], index: 0, kind: input, shape index: {}]
  %s1 = inlined_call_operand.vmem [shape: f32[1,32], index: 1, kind: input, shape index: {}]
  %s2 = inlined_call_operand.vmem [shape: f32[1,32], index: 2, kind: input, shape index: {}]
  %s3 = inlined_call_operand.vmem [shape: f32[4,32,24], index: 3, kind: input, shape index: {}]
  %s4 = inlined_call_operand.vmem [shape: f32[4,1,24], index: 4, kind: input, shape index: {}]
  %s5 = inlined_call_operand.vmem [shape: f32[4,8,32], index: 5, kind: input, shape index: {}]
  %s6 = inlined_call_operand.vmem [shape: f32[1,32], index: 6, kind: input, shape index: {}]
  %s7 = inlined_call_operand.hbm [shape: f32[2,8,32], index: 7, kind: output, shape index: {}]
  %s8 = sld [smem:[#allocation0]]
  $region69: #{tpu_custom_call.1} parent=0
    _
  %s10 = ssub.s32 1, %s8
  %s11 = scalar_select 0, %s10, %s8
  $region1: #{tpu_custom_call.1} parent=0
    #allocation4 [shape = 'u8[8192]{0}', space=vmem, size = 0x2000, scoped, tag = 'output window, operand 0']
    #allocation5 [shape = 's32[2]{0}', space=sflag, size = 0x8, scoped, tag = 'scoped memory for tpu_custom_call.1']
    %12 = vsyncpa [#allocation5], 0
    %s13 = scalar_lea.sflag [#allocation5], 1
    %14 = vsyncpa %s13, 0
    loop: start=0, step=1, limit=10
    $region2: #{tpu_custom_call.1} parent=1 // loop_pre_header
      _
    $region3: #{tpu_custom_call.1} parent=1 // loop_header
      %s16 = sphi 0, %s20
      %p17 = scmp.ge.s32.totalorder %s16, 10
      %s23 = sphi 0, %s42
      %s24 = sphi 0, %s38
      %s25 = sphi 0, %s34
      %s26 = sphi 0, %s23
      %s27 = sphi 0, %s24
      %s28 = sphi 0, %s25
      %s29 = sphi 0, %s26
      %s30 = sphi 0, %s27
      %s31 = sphi 0, %s28
      %s45 = sphi 0, %s47
      %s48 = sphi 0, %s45
      %s49 = sphi 0, %s48
      %s65 = sphi 0, %s49
      %s69 = sphi 0, %s69
      %s71 = sphi 0, %s69
      %s72 = sphi 0, %s71
      %s86 = sphi 0, %s72
      %s90 = sphi 0, %s90
      %s92 = sphi 0, %s90
      %s93 = sphi 0, %s92
      %s107 = sphi 0, %s93
      %s113 = sphi 0, %s115
      %s116 = sphi 0, %s113
      %s117 = sphi 0, %s116
      %s133 = sphi 0, %s117
      %s139 = sphi 0, %s141
      %s142 = sphi 0, %s139
      %s143 = sphi 0, %s142
      %s159 = sphi 0, %s143
      %s165 = sphi 0, %s167
      %s168 = sphi 0, %s165
      %s169 = sphi 0, %s168
      %s185 = sphi 0, %s169
      %s189 = sphi 0, %s189
      %s191 = sphi 0, %s189
      %s192 = sphi 0, %s191
      %s206 = sphi 0, %s192
      %s214 = sphi 0, %s216
      %s217 = sphi 0, %s214
      %s218 = sphi 0, %s217
      %s234 = sphi 0, %s218
    $region4: #{tpu_custom_call.1} parent=1 // loop_header_branch
      %19 = sbr.rel (%p17) target = $region8
    $region5: #{tpu_custom_call.1} parent=1 // loop_body
      %s21 = ssub.s32 %s16, 1
      %s22 = ssub.s32 %s16, 2
      %s32 = sadd.s32 1, %s25
      %p33 = scmp.ge.s32.totalorder %s32, 4
      %s34 = scalar_select %p33, 0, %s32
      %s35 = sadd.s32 1, %s24
      %s36 = scalar_select %p33, %s35, %s24
      %p37 = scmp.ge.s32.totalorder %s36, 1
      %s38 = scalar_select %p37, 0, %s36
      %s39 = sadd.s32 1, %s23
      %s40 = scalar_select %p37, %s39, %s23
      %p41 = scmp.ge.s32.totalorder %s40, 2
      %s42 = scalar_select %p41, 0, %s40
      %s43 = ssub.s32 %s23, %s42
      %p44 = scmp.eq.s32.totalorder %s43, 0
      %s46 = sadd.s32 %s45, 1
      %s47 = scalar_select %p44, %s45, %s46
      %p50 = pneg %p44
      %p51 = scmp.eq.s32.totalorder %s16, 7
      %p52 = por %p50, %p51
      %p53 = scmp.ne.s32.totalorder %s45, %s48
      %p54 = scmp.eq.s32.totalorder %s16, 0
      %p55 = por %p53, %p54
      %p56 = scmp.ne.s32.totalorder %s45, %s48
      %p57 = scmp.eq.s32.totalorder %s21, 7
      %p58 = por %p56, %p57
      %p59 = scmp.ne.s32.totalorder %s48, %s49
      %p60 = scmp.eq.s32.totalorder %s21, 0
      %p61 = por %p59, %p60
      %p62 = scmp.ne.s32.totalorder %s48, %s49
      %p63 = scmp.eq.s32.totalorder %s22, 7
      %p64 = por %p62, %p63
      %p66 = scmp.ne.s32.totalorder %s49, %s65
      %p67 = scmp.eq.s32.totalorder %s22, 0
      %p68 = por %p66, %p67
      %s70 = sadd.s32 %s69, 1
      %p73 = scmp.eq.s32.totalorder %s16, 7
      %p74 = scmp.ne.s32.totalorder %s69, %s71
      %p75 = scmp.eq.s32.totalorder %s16, 0
      %p76 = por %p74, %p75
      %p77 = scmp.ne.s32.totalorder %s69, %s71
      %p78 = scmp.eq.s32.totalorder %s21, 7
      %p79 = por %p77, %p78
      %p80 = scmp.ne.s32.totalorder %s71, %s72
      %p81 = scmp.eq.s32.totalorder %s21, 0
      %p82 = por %p80, %p81
      %p83 = scmp.ne.s32.totalorder %s71, %s72
      %p84 = scmp.eq.s32.totalorder %s22, 7
      %p85 = por %p83, %p84
      %p87 = scmp.ne.s32.totalorder %s72, %s86
      %p88 = scmp.eq.s32.totalorder %s22, 0
      %p89 = por %p87, %p88
      %s91 = sadd.s32 %s90, 1
      %p94 = scmp.eq.s32.totalorder %s16, 7
      %p95 = scmp.ne.s32.totalorder %s90, %s92
      %p96 = scmp.eq.s32.totalorder %s16, 0
      %p97 = por %p95, %p96
      %p98 = scmp.ne.s32.totalorder %s90, %s92
      %p99 = scmp.eq.s32.totalorder %s21, 7
      %p100 = por %p98, %p99
      %p101 = scmp.ne.s32.totalorder %s92, %s93
      %p102 = scmp.eq.s32.totalorder %s21, 0
      %p103 = por %p101, %p102
      %p104 = scmp.ne.s32.totalorder %s92, %s93
      %p105 = scmp.eq.s32.totalorder %s22, 7
      %p106 = por %p104, %p105
      %p108 = scmp.ne.s32.totalorder %s93, %s107
      %p109 = scmp.eq.s32.totalorder %s22, 0
      %p110 = por %p108, %p109
      %s111 = ssub.s32 %s25, %s34
      %p112 = scmp.eq.s32.totalorder %s111, 0
      %s114 = sadd.s32 %s113, 1
      %s115 = scalar_select %p112, %s113, %s114
      %p118 = pneg %p112
      %p119 = scmp.eq.s32.totalorder %s16, 7
      %p120 = por %p118, %p119
      %p121 = scmp.ne.s32.totalorder %s113, %s116
      %p122 = scmp.eq.s32.totalorder %s16, 0
      %p123 = por %p121, %p122
      %p124 = scmp.ne.s32.totalorder %s113, %s116
      %p125 = scmp.eq.s32.totalorder %s21, 7
      %p126 = por %p124, %p125
      %p127 = scmp.ne.s32.totalorder %s116, %s117
      %p128 = scmp.eq.s32.totalorder %s21, 0
      %p129 = por %p127, %p128
      %p130 = scmp.ne.s32.totalorder %s116, %s117
      %p131 = scmp.eq.s32.totalorder %s22, 7
      %p132 = por %p130, %p131
      %p134 = scmp.ne.s32.totalorder %s117, %s133
      %p135 = scmp.eq.s32.totalorder %s22, 0
      %p136 = por %p134, %p135
      %s137 = ssub.s32 %s25, %s34
      %p138 = scmp.eq.s32.totalorder %s137, 0
      %s140 = sadd.s32 %s139, 1
      %s141 = scalar_select %p138, %s139, %s140
      %p144 = pneg %p138
      %p145 = scmp.eq.s32.totalorder %s16, 7
      %p146 = por %p144, %p145
      %p147 = scmp.ne.s32.totalorder %s139, %s142
      %p148 = scmp.eq.s32.totalorder %s16, 0
      %p149 = por %p147, %p148
      %p150 = scmp.ne.s32.totalorder %s139, %s142
      %p151 = scmp.eq.s32.totalorder %s21, 7
      %p152 = por %p150, %p151
      %p153 = scmp.ne.s32.totalorder %s142, %s143
      %p154 = scmp.eq.s32.totalorder %s21, 0
      %p155 = por %p153, %p154
      %p156 = scmp.ne.s32.totalorder %s142, %s143
      %p157 = scmp.eq.s32.totalorder %s22, 7
      %p158 = por %p156, %p157
      %p160 = scmp.ne.s32.totalorder %s143, %s159
      %p161 = scmp.eq.s32.totalorder %s22, 0
      %p162 = por %p160, %p161
      %s163 = ssub.s32 %s25, %s34
      %p164 = scmp.eq.s32.totalorder %s163, 0
      %s166 = sadd.s32 %s165, 1
      %s167 = scalar_select %p164, %s165, %s166
      %p170 = pneg %p164
      %p171 = scmp.eq.s32.totalorder %s16, 7
      %p172 = por %p170, %p171
      %p173 = scmp.ne.s32.totalorder %s165, %s168
      %p174 = scmp.eq.s32.totalorder %s16, 0
      %p175 = por %p173, %p174
      %p176 = scmp.ne.s32.totalorder %s165, %s168
      %p177 = scmp.eq.s32.totalorder %s21, 7
      %p178 = por %p176, %p177
      %p179 = scmp.ne.s32.totalorder %s168, %s169
      %p180 = scmp.eq.s32.totalorder %s21, 0
      %p181 = por %p179, %p180
      %p182 = scmp.ne.s32.totalorder %s168, %s169
      %p183 = scmp.eq.s32.totalorder %s22, 7
      %p184 = por %p182, %p183
      %p186 = scmp.ne.s32.totalorder %s169, %s185
      %p187 = scmp.eq.s32.totalorder %s22, 0
      %p188 = por %p186, %p187
      %s190 = sadd.s32 %s189, 1
      %p193 = scmp.eq.s32.totalorder %s16, 7
      %p194 = scmp.ne.s32.totalorder %s189, %s191
      %p195 = scmp.eq.s32.totalorder %s16, 0
      %p196 = por %p194, %p195
      %p197 = scmp.ne.s32.totalorder %s189, %s191
      %p198 = scmp.eq.s32.totalorder %s21, 7
      %p199 = por %p197, %p198
      %p200 = scmp.ne.s32.totalorder %s191, %s192
      %p201 = scmp.eq.s32.totalorder %s21, 0
      %p202 = por %p200, %p201
      %p203 = scmp.ne.s32.totalorder %s191, %s192
      %p204 = scmp.eq.s32.totalorder %s22, 7
      %p205 = por %p203, %p204
      %p207 = scmp.ne.s32.totalorder %s192, %s206
      %p208 = scmp.eq.s32.totalorder %s22, 0
      %p209 = por %p207, %p208
      %s210 = ssub.s32 %s23, %s42
      %s211 = ssub.s32 %s24, %s38
      %s212 = sor.u32 %s210, %s211
      %p213 = scmp.eq.s32.totalorder %s212, 0
      %s215 = sadd.s32 %s214, 1
      %s216 = scalar_select %p213, %s214, %s215
      %p219 = pneg %p213
      %p220 = scmp.eq.s32.totalorder %s16, 7
      %p221 = por %p219, %p220
      %p222 = scmp.ne.s32.totalorder %s214, %s217
      %p223 = scmp.eq.s32.totalorder %s16, 0
      %p224 = por %p222, %p223
      %p225 = scmp.ne.s32.totalorder %s214, %s217
      %p226 = scmp.eq.s32.totalorder %s21, 7
      %p227 = por %p225, %p226
      %p228 = scmp.ne.s32.totalorder %s217, %s218
      %p229 = scmp.eq.s32.totalorder %s21, 0
      %p230 = por %p228, %p229
      %p231 = scmp.ne.s32.totalorder %s217, %s218
      %p232 = scmp.eq.s32.totalorder %s22, 7
      %p233 = por %p231, %p232
      %p235 = scmp.ne.s32.totalorder %s218, %s234
      %p236 = scmp.eq.s32.totalorder %s22, 0
      %p237 = por %p235, %p236
      %p238 = scmp.le.s32.totalorder 1, %s16
      %p239 = scmp.lt.s32.totalorder %s16, 9
      %p240 = pnand %p238, %p239
      %p241 = pneg %p240
      // Predicated region
      $region9: #{tpu_custom_call.1} parent=5 // pred_check
        _
      $region10: #{tpu_custom_call.1} parent=5 // pred_check_branch
        %243 = sbr.rel (%p240) target = $region12
      $region11: #{tpu_custom_call.1} parent=5 // pred_region
        %s244 = ssub.s32 %s16, 1
        // Predicated region
        $region13: #{tpu_custom_call.1} parent=11 // pred_check
          %p245 = pneg %p82
        $region14: #{tpu_custom_call.1} parent=11 // pred_check_branch
          %247 = sbr.rel (%p245) target = $region16
        $region15: #{tpu_custom_call.1} parent=11 // pred_region
          _
        $region16: #{tpu_custom_call.1} parent=11 // pred_fallthru
          _
        // Predicated region
        $region17: #{tpu_custom_call.1} parent=11 // pred_check
          %p248 = pneg %p103
        $region18: #{tpu_custom_call.1} parent=11 // pred_check_branch
          %250 = sbr.rel (%p248) target = $region20
        $region19: #{tpu_custom_call.1} parent=11 // pred_region
          _
        $region20: #{tpu_custom_call.1} parent=11 // pred_fallthru
          _
        // Predicated region
        $region21: #{tpu_custom_call.1} parent=11 // pred_check
          %p251 = pneg %p202
        $region22: #{tpu_custom_call.1} parent=11 // pred_check_branch
          %253 = sbr.rel (%p251) target = $region24
        $region23: #{tpu_custom_call.1} parent=11 // pred_region
          _
        $region24: #{tpu_custom_call.1} parent=11 // pred_fallthru
          _
      $region12: #{tpu_custom_call.1} parent=5 // pred_fallthru
        _
      %p254 = scmp.lt.s32.totalorder %s16, 8
      // Predicated region
      $region25: #{tpu_custom_call.1} parent=5 // pred_check
        %p255 = pneg %p254
      $region26: #{tpu_custom_call.1} parent=5 // pred_check_branch
        %257 = sbr.rel (%p255) target = $region28
      $region27: #{tpu_custom_call.1} parent=5 // pred_region
        // Predicated region
        $region29: #{tpu_custom_call.1} parent=27 // pred_check
          %p258 = pneg %p55
        $region30: #{tpu_custom_call.1} parent=27 // pred_check_branch
          %260 = sbr.rel (%p258) target = $region32
        $region31: #{tpu_custom_call.1} parent=27 // pred_region
          %p261 = scmp.lt.s32.totalorder %s23, 1
          %s262 = scalar_select %p261, %s23, 1
          %s263 = smul.addr %s262, 8
          %s264 = scalar_lea.vmem %s0, %s263
        $region32: #{tpu_custom_call.1} parent=27 // pred_fallthru
          _
        // Predicated region
        $region33: #{tpu_custom_call.1} parent=27 // pred_check
          %p265 = pneg %p123
        $region34: #{tpu_custom_call.1} parent=27 // pred_check_branch
          %267 = sbr.rel (%p265) target = $region36
        $region35: #{tpu_custom_call.1} parent=27 // pred_region
          %p268 = scmp.lt.s32.totalorder %s25, 3
          %s269 = scalar_select %p268, %s25, 3
          %s270 = smul.addr %s269, 4
          %s271 = smul.addr %s270, 8
          %s272 = scalar_lea.vmem %s3, %s271
        $region36: #{tpu_custom_call.1} parent=27 // pred_fallthru
          _
        // Predicated region
        $region37: #{tpu_custom_call.1} parent=27 // pred_check
          %p273 = pneg %p149
        $region38: #{tpu_custom_call.1} parent=27 // pred_check_branch
          %275 = sbr.rel (%p273) target = $region40
        $region39: #{tpu_custom_call.1} parent=27 // pred_region
          %p276 = scmp.lt.s32.totalorder %s25, 3
          %s277 = scalar_select %p276, %s25, 3
          %s278 = scalar_lea.vmem %s4, %s277
        $region40: #{tpu_custom_call.1} parent=27 // pred_fallthru
          _
        // Predicated region
        $region41: #{tpu_custom_call.1} parent=27 // pred_check
          %p279 = pneg %p175
        $region42: #{tpu_custom_call.1} parent=27 // pred_check_branch
          %281 = sbr.rel (%p279) target = $region44
        $region43: #{tpu_custom_call.1} parent=27 // pred_region
          %p282 = scmp.lt.s32.totalorder %s25, 3
          %s283 = scalar_select %p282, %s25, 3
          %s284 = smul.addr %s283, 8
          %s285 = scalar_lea.vmem %s5, %s284
        $region44: #{tpu_custom_call.1} parent=27 // pred_fallthru
          _
      $region28: #{tpu_custom_call.1} parent=5 // pred_fallthru
        _
      %p286 = scmp.le.s32.totalorder 1, %s16
      %p287 = scmp.lt.s32.totalorder %s16, 9
      %p288 = pnand %p286, %p287
      %p289 = pneg %p288
      // Predicated region
      $region45: #{tpu_custom_call.1} parent=5 // pred_check
        _
      $region46: #{tpu_custom_call.1} parent=5 // pred_check_branch
        %291 = sbr.rel (%p288) target = $region48
      $region47: #{tpu_custom_call.1} parent=5 // pred_region
        %s292 = ssub.s32 %s16, 1
        %p293 = scmp.lt.s32.totalorder %s26, 1
        %s294 = scalar_select %p293, %s26, 1
        %s295 = smul.addr %s294, 8
        %s296 = scalar_lea.vmem %s0, %s295
        %p297 = pneg %p61
        %p298 = pneg %p58
        %p299 = pneg %p82
        %p300 = pneg %p79
        %p301 = pneg %p103
        %p302 = pneg %p100
        %p303 = scmp.lt.s32.totalorder %s28, 3
        %s304 = scalar_select %p303, %s28, 3
        %s305 = smul.addr %s304, 4
        %s306 = smul.addr %s305, 8
        %s307 = scalar_lea.vmem %s3, %s306
        %p308 = pneg %p129
        %p309 = pneg %p126
        %p310 = scmp.lt.s32.totalorder %s28, 3
        %s311 = scalar_select %p310, %s28, 3
        %s312 = scalar_lea.vmem %s4, %s311
        %p313 = pneg %p155
        %p314 = pneg %p152
        %p315 = scmp.lt.s32.totalorder %s28, 3
        %s316 = scalar_select %p315, %s28, 3
        %s317 = smul.addr %s316, 8
        %s318 = scalar_lea.vmem %s5, %s317
        %p319 = pneg %p181
        %p320 = pneg %p178
        %p321 = pneg %p202
        %p322 = pneg %p199
        %p323 = pneg %p230
        %p324 = pneg %p227
        %s325 = sand.u32 %s217, 1
        %s326 = scalar_lea.sflag [#allocation5], %s325
        %s327 = sand.u32 %s217, 1
        %s328 = smul.addr %s327, 8
        %s329 = scalar_lea.vmem [#allocation4], %s328
        %p330 = scmp.lt.s32.totalorder %s26, 1
        %s331 = scalar_select %p330, %s26, 1
        %s332 = smul.addr %s331, 8
        %s333 = scalar_lea.vmem %s0, %s332
        %p334 = scmp.lt.s32.totalorder %s28, 3
        %s335 = scalar_select %p334, %s28, 3
        %s336 = smul.addr %s335, 4
        %s337 = smul.addr %s336, 8
        %s338 = scalar_lea.vmem %s3, %s337
        %p339 = scmp.lt.s32.totalorder %s28, 3
        %s340 = scalar_select %p339, %s28, 3
        %s341 = scalar_lea.vmem %s4, %s340
        %p342 = scmp.lt.s32.totalorder %s28, 3
        %s343 = scalar_select %p342, %s28, 3
        %s344 = smul.addr %s343, 8
        %s345 = scalar_lea.vmem %s5, %s344
        %p346 = scmp.eq.s32.totalorder %s28, 0
        // Predicated region
        $region49: #{tpu_custom_call.1} parent=47 // pred_check
          %p347 = pneg %p346
        $region50: #{tpu_custom_call.1} parent=47 // pred_check_branch
          %349 = sbr.rel (%p347) target = $region52
        $region51: #{tpu_custom_call.1} parent=47 // pred_region
          %v350 = vld [vmem:[%s333] sm:$0xff]
          %vm351 = vcmask 261120
          %v352 = vsel %vm351, %v350, 0.0
          %353 = vadd.xlane.f32.xlu0 %v352
          %v354 = vpop.xlane.xlu0 %353
          %v355 = vrcp.pop 32.0
          %v356 = vmul.f32 %v354, %v355
          %v357 = vsub.f32 %v350, %v356
          %v358 = vmul.f32 %v357, %v357
          %v359 = vsel %vm351, %v358, 0.0
          %360 = vadd.xlane.f32.xlu0 %v359
          %v361 = vpop.xlane.xlu0 %360
          %v362 = vmul.f32 %v361, %v355
          %v363 = vadd.f32 %v362, 1e-05
          %v364 = vrsqrt.pop %v363
          %v365 = vmul.f32 %v357, %v364
          %v366 = vld [vmem:[%s1] sm:$0x1]
          %v368 = vlaneseq
          %v369 = vshrl.u32 %v368, 7
          %v370 = vsub.s32 0, %v369
          %v371 = vrot.slane %v366, %v370
          %v373 = vmul.f32 %v365, %v371
          %v374 = vld [vmem:[%s2] sm:$0x1]
          %v376 = vlaneseq
          %v377 = vshrl.u32 %v376, 7
          %v378 = vsub.s32 0, %v377
          %v379 = vrot.slane %v374, %v378
          %v381 = vadd.f32 %v373, %v379
          %382 = vst.msk [vmem:[#allocation2] sm:$0xff] %vm351, %v381
          %v383 = vld [vmem:[%s6] sm:$0x1]
          %v385 = vlaneseq
          %v386 = vshrl.u32 %v385, 7
          %v387 = vsub.s32 0, %v386
          %v388 = vrot.slane %v383, %v387
          %390 = vst.msk [vmem:[#allocation3] sm:$0xff] %vm351, %v388
        $region52: #{tpu_custom_call.1} parent=47 // pred_fallthru
          _
        %v391 = vld [vmem:[#allocation2] sm:$0xff]
        %v392 = vld [vmem:[%s338] sm:$0xff]
        %v393 = vld [vmem:[%s338 + $0x8] sm:$0xff]
        %v394 = vld [vmem:[%s338 + $0x10] sm:$0xff]
        %v395 = vld [vmem:[%s338 + $0x18] sm:$0xff]
        %v396 = vld [vmem:[%s341] sm:$0x1]
        %v398 = vlaneseq
        %v399 = vshrl.u32 %v398, 7
        %v400 = vsub.s32 0, %v399
        %v401 = vrot.slane %v396, %v400
        %vm403 = vcmask 261120
        %v405 = vsel %vm403, %v391, 0
        %407 = vmatprep.subr.mxu0 0.0
        %408 = vmatpush1.msra.mxu0 0.0
        %409 = vmatprep.subr.mxu0 0.0
        %410 = vmatpush1.msra.mxu0 0.0
        %411 = vmatprep.subr.mxu0 0.0
        %412 = vmatpush1.msra.mxu0 0.0
        %413 = vmatprep.subr.mxu0 0.0
        %414 = vmatpush1.msra.mxu0 0.0
        %415 = vmatprep.subr.mxu0 0.0
        %416 = vmatpush1.msra.mxu0 0.0
        %417 = vmatprep.subr.mxu0 0.0
        %418 = vmatpush1.msra.mxu0 0.0
        %419 = vmatprep.subr.mxu0 0.0
        %420 = vmatpush1.msra.mxu0 0.0
        %421 = vmatprep.subr.mxu0 0.0
        %422 = vmatpush1.msra.mxu0 0.0
        %423 = vmatprep.subr.mxu0 0.0
        %424 = vmatpush1.msra.mxu0 0.0
        %425 = vmatprep.subr.mxu0 0.0
        %426 = vmatpush1.msra.mxu0 0.0
        %427 = vmatprep.subr.mxu0 0.0
        %428 = vmatpush1.msra.mxu0 0.0
        %429 = vmatprep.subr.mxu0 0.0
        %430 = vmatpush1.msra.mxu0 0.0
        %431 = vmatprep.subr.mxu0 0.0
        %432 = vmatpush1.msra.mxu0 %v395
        %433 = vmatprep.subr.mxu0 0.0
        %434 = vmatpush1.msra.mxu0 %v394
        %435 = vmatprep.subr.mxu0 0.0
        %436 = vmatpush1.msra.mxu0 %v393
        %437 = vmatprep.subr.mxu0 0.0
        %438 = vmatpush1.msra.mxu0 %v392
        %439 = vmatprep.subr.mxu0 0.0
        %440 = vmatpush2.msra.mxu0 0.0
        %441 = vmatprep.subr.mxu0 0.0
        %442 = vmatpush2.msra.mxu0 0.0
        %443 = vmatprep.subr.mxu0 0.0
        %444 = vmatpush2.msra.mxu0 0.0
        %445 = vmatprep.subr.mxu0 0.0
        %446 = vmatpush2.msra.mxu0 0.0
        %447 = vmatprep.subr.mxu0 0.0
        %448 = vmatpush2.msra.mxu0 0.0
        %449 = vmatprep.subr.mxu0 0.0
        %450 = vmatpush2.msra.mxu0 0.0
        %451 = vmatprep.subr.mxu0 0.0
        %452 = vmatpush2.msra.mxu0 0.0
        %453 = vmatprep.subr.mxu0 0.0
        %454 = vmatpush2.msra.mxu0 0.0
        %455 = vmatprep.subr.mxu0 0.0
        %456 = vmatpush2.msra.mxu0 0.0
        %457 = vmatprep.subr.mxu0 0.0
        %458 = vmatpush2.msra.mxu0 0.0
        %459 = vmatprep.subr.mxu0 0.0
        %460 = vmatpush2.msra.mxu0 0.0
        %461 = vmatprep.subr.mxu0 0.0
        %462 = vmatpush2.msra.mxu0 0.0
        %463 = vmatprep.subr.mxu0 0.0
        %464 = vmatpush2.msra.mxu0 0.0
        %465 = vmatprep.subr.mxu0 0.0
        %466 = vmatpush2.msra.mxu0 0.0
        %467 = vmatprep.subr.mxu0 0.0
        %468 = vmatpush2.msra.mxu0 0.0
        %469 = vmatprep.subr.mxu0 0.0
        %470 = vmatpush2.msra.mxu0 0.0
        %471 = vmatprep.mubr.f32.mxu0 0.0
        %472 = vmatmul.mubr.f32.gmra.mxu0 %v405
        %v473 = vpop.f32.mrf.mxu0
        %v474 = vadd.f32 %v401, %v473
        %v475 = vpop.f32.mrf.mxu0
        %476 = vdwg.mxu0
        %478 = vrot.lane.b32.xlu0 %v474, 120
        %v479 = vpop.permute.xlu0 %478
        %vm480 = vcmask 64512
        %v481 = vsel %vm480, %v474, 0
        %v483 = vsel %vm480, %v479, 0
        %485 = vmatprep.subr.mxu0 0.0
        %486 = vmatpush1.xpose.msra.mxu0 0.0
        %487 = vmatprep.subr.mxu0 0.0
        %488 = vmatpush1.xpose.msra.mxu0 0.0
        %489 = vmatprep.subr.mxu0 0.0
        %490 = vmatpush1.xpose.msra.mxu0 0.0
        %491 = vmatprep.subr.mxu0 0.0
        %492 = vmatpush1.xpose.msra.mxu0 0.0
        %493 = vmatprep.subr.mxu0 0.0
        %494 = vmatpush1.xpose.msra.mxu0 0.0
        %495 = vmatprep.subr.mxu0 0.0
        %496 = vmatpush1.xpose.msra.mxu0 0.0
        %497 = vmatprep.subr.mxu0 0.0
        %498 = vmatpush1.xpose.msra.mxu0 0.0
        %499 = vmatprep.subr.mxu0 0.0
        %500 = vmatpush1.xpose.msra.mxu0 0.0
        %501 = vmatprep.subr.mxu0 0.0
        %502 = vmatpush1.xpose.msra.mxu0 0.0
        %503 = vmatprep.subr.mxu0 0.0
        %504 = vmatpush1.xpose.msra.mxu0 0.0
        %505 = vmatprep.subr.mxu0 0.0
        %506 = vmatpush1.xpose.msra.mxu0 0.0
        %507 = vmatprep.subr.mxu0 0.0
        %508 = vmatpush1.xpose.msra.mxu0 0.0
        %509 = vmatprep.subr.mxu0 0.0
        %510 = vmatpush1.xpose.msra.mxu0 0.0
        %511 = vmatprep.subr.mxu0 0.0
        %512 = vmatpush1.xpose.msra.mxu0 0.0
        %513 = vmatprep.subr.mxu0 0.0
        %514 = vmatpush1.xpose.msra.mxu0 0.0
        %515 = vmatprep.subr.mxu0 0.0
        %516 = vmatpush1.xpose.msra.mxu0 %v483
        %517 = vmatprep.subr.mxu0 0.0
        %518 = vmatpush2.xpose.msra.mxu0 0.0
        %519 = vmatprep.subr.mxu0 0.0
        %520 = vmatpush2.xpose.msra.mxu0 0.0
        %521 = vmatprep.subr.mxu0 0.0
        %522 = vmatpush2.xpose.msra.mxu0 0.0
        %523 = vmatprep.subr.mxu0 0.0
        %524 = vmatpush2.xpose.msra.mxu0 0.0
        %525 = vmatprep.subr.mxu0 0.0
        %526 = vmatpush2.xpose.msra.mxu0 0.0
        %527 = vmatprep.subr.mxu0 0.0
        %528 = vmatpush2.xpose.msra.mxu0 0.0
        %529 = vmatprep.subr.mxu0 0.0
        %530 = vmatpush2.xpose.msra.mxu0 0.0
        %531 = vmatprep.subr.mxu0 0.0
        %532 = vmatpush2.xpose.msra.mxu0 0.0
        %533 = vmatprep.subr.mxu0 0.0
        %534 = vmatpush2.xpose.msra.mxu0 0.0
        %535 = vmatprep.subr.mxu0 0.0
        %536 = vmatpush2.xpose.msra.mxu0 0.0
        %537 = vmatprep.subr.mxu0 0.0
        %538 = vmatpush2.xpose.msra.mxu0 0.0
        %539 = vmatprep.subr.mxu0 0.0
        %540 = vmatpush2.xpose.msra.mxu0 0.0
        %541 = vmatprep.subr.mxu0 0.0
        %542 = vmatpush2.xpose.msra.mxu0 0.0
        %543 = vmatprep.subr.mxu0 0.0
        %544 = vmatpush2.xpose.msra.mxu0 0.0
        %545 = vmatprep.subr.mxu0 0.0
        %546 = vmatpush2.xpose.msra.mxu0 0.0
        %547 = vmatprep.subr.mxu0 0.0
        %548 = vmatpush2.xpose.msra.mxu0 0.0
        %549 = vmatprep.mubr.f32.mxu0 0.0
        %550 = vmatmul.mubr.f32.gmra.mxu0 %v481
        %v551 = vpop.f32.mrf.mxu0
        %v552 = vadd.f32 0.0, %v551
        %v553 = vpop.f32.mrf.mxu0
        %554 = vdwg.mxu0
        %v555 = vsel %vm480, %v552, -inf
        %556 = vmax.xlane.f32.xlu0 %v555
        %v557 = vpop.xlane.xlu0 %556
        %v558 = vsub.f32 %v552, %v557
        %v559 = vmul.f32 %v558, 1.442695
        %v560 = vpow.pop %v559
        %v561 = vsel %vm480, %v560, 0.0
        %562 = vadd.xlane.f32.xlu0 %v561
        %v563 = vpop.xlane.xlu0 %562
        %564 = vrot.lane.b32.xlu0 %v474, 112
        %v565 = vpop.permute.xlu0 %564
        %v568 = vsel %vm480, %v560, 0
        %570 = vmatprep.subr.mxu0 0.0
        %571 = vmatpush1.msra.mxu0 0.0
        %572 = vmatprep.subr.mxu0 0.0
        %573 = vmatpush1.msra.mxu0 0.0
        %574 = vmatprep.subr.mxu0 0.0
        %575 = vmatpush1.msra.mxu0 0.0
        %576 = vmatprep.subr.mxu0 0.0
        %577 = vmatpush1.msra.mxu0 0.0
        %578 = vmatprep.subr.mxu0 0.0
        %579 = vmatpush1.msra.mxu0 0.0
        %580 = vmatprep.subr.mxu0 0.0
        %581 = vmatpush1.msra.mxu0 0.0
        %582 = vmatprep.subr.mxu0 0.0
        %583 = vmatpush1.msra.mxu0 0.0
        %584 = vmatprep.subr.mxu0 0.0
        %585 = vmatpush1.msra.mxu0 0.0
        %586 = vmatprep.subr.mxu0 0.0
        %587 = vmatpush1.msra.mxu0 0.0
        %588 = vmatprep.subr.mxu0 0.0
        %589 = vmatpush1.msra.mxu0 0.0
        %590 = vmatprep.subr.mxu0 0.0
        %591 = vmatpush1.msra.mxu0 0.0
        %592 = vmatprep.subr.mxu0 0.0
        %593 = vmatpush1.msra.mxu0 0.0
        %594 = vmatprep.subr.mxu0 0.0
        %595 = vmatpush1.msra.mxu0 0.0
        %596 = vmatprep.subr.mxu0 0.0
        %597 = vmatpush1.msra.mxu0 0.0
        %598 = vmatprep.subr.mxu0 0.0
        %599 = vmatpush1.msra.mxu0 0.0
        %600 = vmatprep.subr.mxu0 0.0
        %601 = vmatpush1.msra.mxu0 %v565
        %602 = vmatprep.subr.mxu0 0.0
        %603 = vmatpush2.msra.mxu0 0.0
        %604 = vmatprep.subr.mxu0 0.0
        %605 = vmatpush2.msra.mxu0 0.0
        %606 = vmatprep.subr.mxu0 0.0
        %607 = vmatpush2.msra.mxu0 0.0
        %608 = vmatprep.subr.mxu0 0.0
        %609 = vmatpush2.msra.mxu0 0.0
        %610 = vmatprep.subr.mxu0 0.0
        %611 = vmatpush2.msra.mxu0 0.0
        %612 = vmatprep.subr.mxu0 0.0
        %613 = vmatpush2.msra.mxu0 0.0
        %614 = vmatprep.subr.mxu0 0.0
        %615 = vmatpush2.msra.mxu0 0.0
        %616 = vmatprep.subr.mxu0 0.0
        %617 = vmatpush2.msra.mxu0 0.0
        %618 = vmatprep.subr.mxu0 0.0
        %619 = vmatpush2.msra.mxu0 0.0
        %620 = vmatprep.subr.mxu0 0.0
        %621 = vmatpush2.msra.mxu0 0.0
        %622 = vmatprep.subr.mxu0 0.0
        %623 = vmatpush2.msra.mxu0 0.0
        %624 = vmatprep.subr.mxu0 0.0
        %625 = vmatpush2.msra.mxu0 0.0
        %626 = vmatprep.subr.mxu0 0.0
        %627 = vmatpush2.msra.mxu0 0.0
        %628 = vmatprep.subr.mxu0 0.0
        %629 = vmatpush2.msra.mxu0 0.0
        %630 = vmatprep.subr.mxu0 0.0
        %631 = vmatpush2.msra.mxu0 0.0
        %632 = vmatprep.subr.mxu0 0.0
        %633 = vmatpush2.msra.mxu0 0.0
        %634 = vmatprep.mubr.f32.mxu0 0.0
        %635 = vmatmul.mubr.f32.gmra.mxu0 %v568
        %v636 = vpop.f32.mrf.mxu0
        %v637 = vadd.f32 0.0, %v636
        %v638 = vpop.f32.mrf.mxu0
        %639 = vdwg.mxu0
        %v640 = vrcp.pop %v563
        %v641 = vmul.f32 %v637, %v640
        %v642 = vld [vmem:[#allocation3] sm:$0xff]
        %v643 = vld [vmem:[%s345] sm:$0xff]
        %v645 = vsel %vm480, %v641, 0
        %647 = vmatprep.subr.mxu0 0.0
        %648 = vmatpush1.msra.mxu0 0.0
        %649 = vmatprep.subr.mxu0 0.0
        %650 = vmatpush1.msra.mxu0 0.0
        %651 = vmatprep.subr.mxu0 0.0
        %652 = vmatpush1.msra.mxu0 0.0
        %653 = vmatprep.subr.mxu0 0.0
        %654 = vmatpush1.msra.mxu0 0.0
        %655 = vmatprep.subr.mxu0 0.0
        %656 = vmatpush1.msra.mxu0 0.0
        %657 = vmatprep.subr.mxu0 0.0
        %658 = vmatpush1.msra.mxu0 0.0
        %659 = vmatprep.subr.mxu0 0.0
        %660 = vmatpush1.msra.mxu0 0.0
        %661 = vmatprep.subr.mxu0 0.0
        %662 = vmatpush1.msra.mxu0 0.0
        %663 = vmatprep.subr.mxu0 0.0
        %664 = vmatpush1.msra.mxu0 0.0
        %665 = vmatprep.subr.mxu0 0.0
        %666 = vmatpush1.msra.mxu0 0.0
        %667 = vmatprep.subr.mxu0 0.0
        %668 = vmatpush1.msra.mxu0 0.0
        %669 = vmatprep.subr.mxu0 0.0
        %670 = vmatpush1.msra.mxu0 0.0
        %671 = vmatprep.subr.mxu0 0.0
        %672 = vmatpush1.msra.mxu0 0.0
        %673 = vmatprep.subr.mxu0 0.0
        %674 = vmatpush1.msra.mxu0 0.0
        %675 = vmatprep.subr.mxu0 0.0
        %676 = vmatpush1.msra.mxu0 0.0
        %677 = vmatprep.subr.mxu0 0.0
        %678 = vmatpush1.msra.mxu0 %v643
        %679 = vmatprep.subr.mxu0 0.0
        %680 = vmatpush2.msra.mxu0 0.0
        %681 = vmatprep.subr.mxu0 0.0
        %682 = vmatpush2.msra.mxu0 0.0
        %683 = vmatprep.subr.mxu0 0.0
        %684 = vmatpush2.msra.mxu0 0.0
        %685 = vmatprep.subr.mxu0 0.0
        %686 = vmatpush2.msra.mxu0 0.0
        %687 = vmatprep.subr.mxu0 0.0
        %688 = vmatpush2.msra.mxu0 0.0
        %689 = vmatprep.subr.mxu0 0.0
        %690 = vmatpush2.msra.mxu0 0.0
        %691 = vmatprep.subr.mxu0 0.0
        %692 = vmatpush2.msra.mxu0 0.0
        %693 = vmatprep.subr.mxu0 0.0
        %694 = vmatpush2.msra.mxu0 0.0
        %695 = vmatprep.subr.mxu0 0.0
        %696 = vmatpush2.msra.mxu0 0.0
        %697 = vmatprep.subr.mxu0 0.0
        %698 = vmatpush2.msra.mxu0 0.0
        %699 = vmatprep.subr.mxu0 0.0
        %700 = vmatpush2.msra.mxu0 0.0
        %701 = vmatprep.subr.mxu0 0.0
        %702 = vmatpush2.msra.mxu0 0.0
        %703 = vmatprep.subr.mxu0 0.0
        %704 = vmatpush2.msra.mxu0 0.0
        %705 = vmatprep.subr.mxu0 0.0
        %706 = vmatpush2.msra.mxu0 0.0
        %707 = vmatprep.subr.mxu0 0.0
        %708 = vmatpush2.msra.mxu0 0.0
        %709 = vmatprep.subr.mxu0 0.0
        %710 = vmatpush2.msra.mxu0 0.0
        %711 = vmatprep.mubr.f32.mxu0 0.0
        %712 = vmatmul.mubr.f32.gmra.mxu0 %v645
        %v713 = vpop.f32.mrf.mxu0
        %v714 = vadd.f32 0.0, %v713
        %v715 = vpop.f32.mrf.mxu0
        %716 = vdwg.mxu0
        %v717 = vadd.f32 %v642, %v714
        %718 = vst.msk [vmem:[#allocation3] sm:$0xff] %vm403, %v717
        %p719 = scmp.eq.s32.totalorder %s28, 3
        // Predicated region
        $region53: #{tpu_custom_call.1} parent=47 // pred_check
          %p720 = pneg %p719
        $region54: #{tpu_custom_call.1} parent=47 // pred_check_branch
          %722 = sbr.rel (%p720) target = $region56
        $region55: #{tpu_custom_call.1} parent=47 // pred_region
          %v723 = vld [vmem:[#allocation3] sm:$0xff]
          %724 = vst.msk [vmem:[%s329] sm:$0xff] %vm403, %v723
        $region56: #{tpu_custom_call.1} parent=47 // pred_fallthru
          _
        %s725 = sand.u32 %s217, 1
        %s726 = scalar_lea.sflag [#allocation5], %s725
        %s727 = sand.u32 %s217, 1
        %s728 = smul.addr %s727, 8
        %s729 = scalar_lea.vmem [#allocation4], %s728
        // Predicated region
        $region57: #{tpu_custom_call.1} parent=47 // pred_check
          %p730 = pneg %p227
        $region58: #{tpu_custom_call.1} parent=47 // pred_check_branch
          %732 = sbr.rel (%p730) target = $region60
        $region59: #{tpu_custom_call.1} parent=47 // pred_region
          %s734 = ssub.s32 128, 128
          %735 = vsyncadd %s726, %s734
          %s736 = sadd.s32 %s27, %s26
          %s737 = smul.addr %s736, 128
          %s738 = scalar_lea.hbm %s7, %s737
          %s740 = sshll.u32 %s729, 4
          %s741 = int_to_ptr.vmem [resolvable:$true] %s740
          %743 = dma.vmem_to_hbm [thread:$0]  %s741, 128, %s738, %s726
        $region60: #{tpu_custom_call.1} parent=47 // pred_fallthru
          _
      $region48: #{tpu_custom_call.1} parent=5 // pred_fallthru
        _
      %p744 = scmp.le.s32.totalorder 2, %s16
      // Predicated region
      $region61: #{tpu_custom_call.1} parent=5 // pred_check
        %p745 = pneg %p744
      $region62: #{tpu_custom_call.1} parent=5 // pred_check_branch
        %747 = sbr.rel (%p745) target = $region64
      $region63: #{tpu_custom_call.1} parent=5 // pred_region
        %s748 = ssub.s32 %s16, 2
        // Predicated region
        $region65: #{tpu_custom_call.1} parent=63 // pred_check
          %p749 = pneg %p233
        $region66: #{tpu_custom_call.1} parent=63 // pred_check_branch
          %751 = sbr.rel (%p749) target = $region68
        $region67: #{tpu_custom_call.1} parent=63 // pred_region
          %s752 = sand.u32 %s218, 1
          %s753 = scalar_lea.sflag [#allocation5], %s752
          %s754 = sand.u32 %s218, 1
          %s755 = smul.addr %s754, 8
          %s756 = scalar_lea.vmem [#allocation4], %s755
          %757 = dma.done %s753, 128
        $region68: #{tpu_custom_call.1} parent=63 // pred_fallthru
          _
      $region64: #{tpu_custom_call.1} parent=5 // pred_fallthru
        _
    $region6: #{tpu_custom_call.1} parent=1 // loop_footer
      %s20 = sadd.s32 1, %s16
    $region7: #{tpu_custom_call.1} parent=1 // loop_footer_branch
      %15 = sbr.rel target = $region3
    $region8: #{tpu_custom_call.1} parent=1 // loop_exit
      _
    %758 = vsyncpa [#allocation5], 1
    %s759 = scalar_lea.sflag [#allocation5], 1
    %760 = vsyncpa %s759, 1

</llo_original>
